<compile_context>
chip_gen: v7x
topology: tpu7x:2x2x1
jax: 0.10.0
libtpu: 0.0.40
codegen_flags: <defaults>
</compile_context>

<pallas_src>
import functools

import jax
import jax.numpy as jnp
from jax.experimental import pallas as pl
from jax.experimental.pallas import tpu as pltpu


def _round_up(x, m):
    return (x + m - 1) // m * m


def _pick_tile(dim, preferred, align):
    """Pick a tile size near `preferred` (multiple of `align`); prefer an exact
    divisor of `dim` so no pad/slice pass is needed."""
    if dim <= preferred:
        return _round_up(max(dim, 1), align)
    if dim % align == 0:
        # Search downward from `preferred` (but not below preferred/2) for a divisor.
        t = (preferred // align) * align
        while t >= max(align, preferred // 2):
            if dim % t == 0:
                return t
            t -= align
    return preferred


def _hw_config():
    """Best-effort generation-aware defaults (preferred tm + scoped VMEM cap).
    Falls back to values that are safe on every generation."""
    tm_pref = 512
    vmem_limit = 48 * 1024 * 1024
    try:
        info = pltpu.get_tpu_info()
        vmem_bytes = int(info.vmem_capacity_bytes)
        # ~3/4 of physical VMEM: ~96 MiB on v5e/v6e (128 MiB), ~48 MiB on v7x (64 MiB).
        vmem_limit = min((vmem_bytes * 3) // 4, 96 * 1024 * 1024)
        name = str(getattr(info, "chip_version", "")).lower()
        if "v6" in name:
            tm_pref = 768   # v6e: ~650 flops/weight-byte needed to hit the MXU roofline
        elif "v5e" in name or ("v5" in name and "lite" in name):
            tm_pref = 256   # v5e: memory-bound, already balanced around ~240
        else:
            tm_pref = 512   # v7x / unknown: ~311 flops/byte balance point
    except Exception:
        pass
    return tm_pref, vmem_limit


def _downsample_kernel(x_ref, w_ref, b_ref, o_ref, acc_ref, *, compute_dtype):
    k = pl.program_id(2)

    @pl.when(k == 0)
    def _init():
        # Fold the bias into the accumulator init (this branch writes the whole
        # tile anyway), so the epilogue is just SiLU.
        acc_ref[...] = jnp.broadcast_to(b_ref[...], acc_ref.shape)

    # Cast activations on the VPU right before the MXU (hides under the matmul)
    # instead of paying a separate wrapper-side HBM pass; weight is pre-cast once.
    acc_ref[...] += jnp.dot(x_ref[...].astype(compute_dtype), w_ref[...],
                            preferred_element_type=jnp.float32)

    @pl.when(k == pl.num_programs(2) - 1)
    def _finalize():
        z = acc_ref[...]
        o_ref[...] = (z * jax.nn.sigmoid(z)).astype(o_ref.dtype)


def prepare_downsample_params(w_t, b, *, tn_pref=512, tk_pref=512,
                              compute_dtype=jnp.bfloat16):
    """One-time (setup-time) weight/bias preparation: pick N/K tiles, pad to tile
    boundaries and cast the weight to the MXU compute dtype. Hoisted out of the
    per-call path so repeated calls pay no extra weight HBM passes."""
    K, N = w_t.shape
    tn = _pick_tile(N, tn_pref, 128)
    tk = _pick_tile(K, tk_pref, 128)
    Np, Kp = _round_up(N, tn), _round_up(K, tk)

    w_c = w_t.astype(compute_dtype)
    if (Kp, Np) != (K, N):
        w_c = jnp.zeros((Kp, Np), compute_dtype).at[:K, :N].set(w_c)
    b_c = b.astype(jnp.float32).reshape(1, N)
    if Np != N:
        b_c = jnp.zeros((1, Np), jnp.float32).at[:, :N].set(b_c)

    return dict(w=w_c, b=b_c, K=K, N=N, tn=tn, tk=tk, compute_dtype=compute_dtype)


def downsample_apply(x, params, *, tm_pref=None, out_dtype=None):
    """x: [M, in_features]; params from prepare_downsample_params.
    Returns silu(x @ W^T + b) with shape [M, out_features]."""
    M, K = x.shape
    assert K == params["K"], "in_features mismatch"
    N = params["N"]
    Kp, Np = params["w"].shape
    tn, tk = params["tn"], params["tk"]
    compute_dtype = params["compute_dtype"]
    out_dtype = out_dtype or x.dtype

    tm_default, vmem_limit = _hw_config()
    tm = _pick_tile(M, tm_pref or tm_default, 8)
    Mp = _round_up(M, tm)

    # v7x has 2 TensorCores: ensure >=2 blocks along a "parallel" axis when the
    # problem is big enough so both cores get work (no-op on v5e/v6e).
    if (Mp // tm) * (Np // tn) == 1:
        if tn >= 256 and (tn // 2) % 128 == 0:
            tn //= 2
        elif tm >= 16 and (tm // 2) % 8 == 0:
            tm //= 2

    # Pad activations only when needed: the K remainder must be zero-padded for
    # reduction correctness; aligned shapes take the zero-copy fast path.
    if (Mp, Kp) != (M, K):
        x_p = jnp.zeros((Mp, Kp), x.dtype).at[:M, :K].set(x)
    else:
        x_p = x

    grid = (Mp // tm, Np // tn, Kp // tk)
    n_i, n_j, n_k = grid

    # Weight spec: extra buffering for small-M, long-K (decode-like) shapes where
    # DMA issue latency (not bandwidth) can be exposed.
    if n_i == 1 and n_k >= 3 and tm <= 128:
        w_spec = pl.BlockSpec((tk, tn), lambda i, j, k: (k, j),
                              pipeline_mode=pl.Buffered(3))
    else:
        w_spec = pl.BlockSpec((tk, tn), lambda i, j, k: (k, j))

    x_bytes = Mp * Kp * x_p.dtype.itemsize
    w_bytes = Kp * Np * params["w"].dtype.itemsize
    out_bytes = Mp * Np * jnp.dtype(out_dtype).itemsize
    cost = pl.CostEstimate(
        flops=2 * Mp * Np * Kp,
        transcendentals=Mp * Np,                                  # sigmoid epilogue
        bytes_accessed=n_j * x_bytes + n_i * w_bytes + out_bytes + Np * 4,
    )

    kernel = functools.partial(_downsample_kernel, compute_dtype=compute_dtype)

    out_padded = pl.pallas_call(
        kernel,
        out_shape=jax.ShapeDtypeStruct((Mp, Np), out_dtype),
        grid_spec=pltpu.PrefetchScalarGridSpec(
            num_scalar_prefetch=0,
            grid=grid,
            in_specs=[
                pl.BlockSpec((tm, tk), lambda i, j, k: (i, k)),   # activations
                w_spec,                                           # weight [K, N]
                pl.BlockSpec((1, tn), lambda i, j, k: (0, j)),    # bias
            ],
            out_specs=pl.BlockSpec((tm, tn), lambda i, j, k: (i, j)),
            scratch_shapes=[pltpu.VMEM((tm, tn), jnp.float32)],   # f32 accumulator
        ),
        compiler_params=pltpu.CompilerParams(
            dimension_semantics=("parallel", "parallel", "arbitrary"),
            vmem_limit_bytes=vmem_limit,
        ),
        cost_estimate=cost,
    )(x_p, params["w"], params["b"])

    if (Mp, Np) != (M, N):
        return out_padded[:M, :N]
    return out_padded


def downsample(x, w_t, b, *, compute_dtype=jnp.bfloat16, out_dtype=None):
    """Convenience one-shot wrapper: silu(x @ w_t + b).  w_t is the PyTorch
    nn.Linear weight pre-transposed to [in_features, out_features].  For repeated
    calls, build params once with prepare_downsample_params and reuse them."""
    params = prepare_downsample_params(w_t, b, compute_dtype=compute_dtype)
    return downsample_apply(x, params, out_dtype=out_dtype)


if __name__ == "__main__":
    key = jax.random.PRNGKey(0)
    k_x, k_w, k_b = jax.random.split(key, 3)

    batch = 8
    in_features = 32
    out_features = 64

    # PyTorch nn.Linear stores weight as [out, in]; we keep its transpose
    # [in, out] so the kernel does a plain x @ W matmul on the MXU.
    x = jax.random.normal(k_x, (batch, in_features), dtype=jnp.float32)
    w_t = (jax.random.normal(k_w, (in_features, out_features), dtype=jnp.float32)
           * (1.0 / jnp.sqrt(in_features)))
    b = jax.random.normal(k_b, (out_features,), dtype=jnp.float32) * 0.1

    params = prepare_downsample_params(w_t, b)   # setup-time weight pad/cast (hoisted)
    y = downsample_apply(x, params)
    jax.block_until_ready(y)

    # Reference matching the kernel numerics (bf16 operands, f32 accumulation):
    # silu(x @ W^T + b).
    xr = x.astype(jnp.bfloat16).astype(jnp.float32)
    wr = w_t.astype(jnp.bfloat16).astype(jnp.float32)
    z_ref = xr @ wr + b[None, :]
    y_ref = z_ref * jax.nn.sigmoid(z_ref)
    assert y.shape == (batch, out_features)
    assert jnp.allclose(y, y_ref, atol=1e-3, rtol=1e-3), "mismatch vs reference"

    print("KERNEL_OK")
</pallas_src>

<mosaic_0001>
module attributes {stable_mosaic.version = 11 : i64} {
  func.func @_downsample_kernel(%arg0: i32, %arg1: i32, %arg2: i32, %arg3: memref<8x128xf32, #tpu.memory_space<vmem>>, %arg4: memref<128x128xbf16, #tpu.memory_space<vmem>>, %arg5: memref<1x128xf32, #tpu.memory_space<vmem>>, %arg6: memref<8x128xf32, #tpu.memory_space<vmem>>, %arg7: memref<8x128xf32, #tpu.memory_space<vmem>>) attributes {dimension_semantics = [#tpu.dimension_semantics<parallel>, #tpu.dimension_semantics<parallel>, #tpu.dimension_semantics<arbitrary>], iteration_bounds = array<i64: 1, 1, 1>, scalar_prefetch = 0 : i64, scratch_operands = 1 : i64, tpu.core_type = #tpu.core_type<tc>, window_params = [{transform_indices = @transform_0, window_bounds = array<i64: 8, 128>}, {transform_indices = @transform_1, window_bounds = array<i64: 128, 128>}, {transform_indices = @transform_2, window_bounds = array<i64: 1, 128>}, {transform_indices = @transform_3, window_bounds = array<i64: 8, 128>}]} {
    %c0_i32 = arith.constant 0 : i32
    %0 = arith.cmpi eq, %arg2, %c0_i32 : i32
    %1 = arith.extui %0 : i1 to i32
    %c0_i32_0 = arith.constant 0 : i32
    %2 = arith.cmpi ne, %1, %c0_i32_0 : i32
    scf.if %2 {
      %c0_10 = arith.constant 0 : index
      %c0_11 = arith.constant 0 : index
      %13 = vector.load %arg5[%c0_10, %c0_11] : memref<1x128xf32, #tpu.memory_space<vmem>>, vector<1x128xf32>
      %14 = vector.shape_cast %13 : vector<1x128xf32> to vector<1x128xf32>
      %15 = vector.broadcast %14 : vector<1x128xf32> to vector<8x128xf32>
      %c0_12 = arith.constant 0 : index
      %c0_13 = arith.constant 0 : index
      %16 = vector.load %arg7[%c0_12, %c0_13] : memref<8x128xf32, #tpu.memory_space<vmem>>, vector<8x128xf32>
      tpu.vector_store %arg7[%c0_12, %c0_13], %15 {strides = array<i32>} : memref<8x128xf32, #tpu.memory_space<vmem>>, vector<8x128xf32>,
    } else {
    }
    %c0 = arith.constant 0 : index
    %c0_1 = arith.constant 0 : index
    %3 = vector.load %arg7[%c0, %c0_1] : memref<8x128xf32, #tpu.memory_space<vmem>>, vector<8x128xf32>
    %c0_2 = arith.constant 0 : index
    %c0_3 = arith.constant 0 : index
    %4 = vector.load %arg3[%c0_2, %c0_3] : memref<8x128xf32, #tpu.memory_space<vmem>>, vector<8x128xf32>
    %5 = arith.truncf %4 : vector<8x128xf32> to vector<8x128xbf16>
    %c0_4 = arith.constant 0 : index
    %c0_5 = arith.constant 0 : index
    %6 = vector.load %arg4[%c0_4, %c0_5] : memref<128x128xbf16, #tpu.memory_space<vmem>>, vector<128x128xbf16>
    %cst = arith.constant dense<0.000000e+00> : vector<8x128xf32>
    %7 = tpu.matmul %5, %6, %cst {dimension_numbers = #tpu.dot_dimension_numbers<[1], [0], [0], [1], [0, 0, 1, 1], [], []>} : vector<8x128xbf16>, vector<128x128xbf16>, vector<8x128xf32> -> vector<8x128xf32>
    %8 = arith.addf %3, %7 : vector<8x128xf32>
    %c0_6 = arith.constant 0 : index
    %c0_7 = arith.constant 0 : index
    %9 = vector.load %arg7[%c0_6, %c0_7] : memref<8x128xf32, #tpu.memory_space<vmem>>, vector<8x128xf32>
    tpu.vector_store %arg7[%c0_6, %c0_7], %8 {strides = array<i32>} : memref<8x128xf32, #tpu.memory_space<vmem>>, vector<8x128xf32>,
    %c0_i32_8 = arith.constant 0 : i32
    %10 = arith.cmpi eq, %arg2, %c0_i32_8 : i32
    %11 = arith.extui %10 : i1 to i32
    %c0_i32_9 = arith.constant 0 : i32
    %12 = arith.cmpi ne, %11, %c0_i32_9 : i32
    scf.if %12 {
      %c0_10 = arith.constant 0 : index
      %c0_11 = arith.constant 0 : index
      %13 = vector.load %arg7[%c0_10, %c0_11] : memref<8x128xf32, #tpu.memory_space<vmem>>, vector<8x128xf32>
      %14 = arith.negf %13 : vector<8x128xf32>
      %15 = math.exp %14 : vector<8x128xf32>
      %cst_12 = arith.constant 1.000000e+00 : f32
      %16 = vector.broadcast %cst_12 : f32 to vector<8x128xf32>
      %17 = arith.addf %16, %15 : vector<8x128xf32>
      %18 = arith.divf %16, %17 : vector<8x128xf32>
      %19 = arith.mulf %13, %18 : vector<8x128xf32>
      %c0_13 = arith.constant 0 : index
      %c0_14 = arith.constant 0 : index
      %20 = vector.load %arg6[%c0_13, %c0_14] : memref<8x128xf32, #tpu.memory_space<vmem>>, vector<8x128xf32>
      tpu.vector_store %arg6[%c0_13, %c0_14], %19 {strides = array<i32>} : memref<8x128xf32, #tpu.memory_space<vmem>>, vector<8x128xf32>,
    } else {
    }
    return
  }
  func.func @transform_0(%arg0: i32, %arg1: i32, %arg2: i32) -> (i32, i32) {
    %c0_i32 = arith.constant 0 : i32
    return %arg0, %arg2 : i32, i32
  }
  func.func @transform_1(%arg0: i32, %arg1: i32, %arg2: i32) -> (i32, i32) {
    %c0_i32 = arith.constant 0 : i32
    return %arg2, %arg1 : i32, i32
  }
  func.func @transform_2(%arg0: i32, %arg1: i32, %arg2: i32) -> (i32, i32) {
    %c0_i32 = arith.constant 0 : i32
    %c0_i32_0 = arith.constant 0 : i32
    return %c0_i32, %arg1 : i32, i32
  }
  func.func @transform_3(%arg0: i32, %arg1: i32, %arg2: i32) -> (i32, i32) {
    %c0_i32 = arith.constant 0 : i32
    return %arg0, %arg1 : i32, i32
  }
}

</mosaic_0001>

<llo_original>
// kernel: tpu_custom_call.1
$region0: #{tpu_custom_call.1}
  #allocation0 [shape = 'u32[]', space=smem, size = 0x4, offset = 0x4, fixed_abs, tag = 'smem constant byte address 0x4 - core index']
  #allocation1 [shape = 'u32[144,128]{1,0:T(1,128)}', space=vmem, size = 0x12000, scoped, tag = 'internal scratch']
  #allocation2 [shape = 'f32[8,128]{1,0:T(8,128)}', space=vmem, size = 0x1000, scoped, tag = 'scratch operand']
  %s0 = inlined_call_operand.hbm [shape: f32[8,128], index: 0, kind: input, shape index: {}]
  %s1 = inlined_call_operand.hbm [shape: bf16[128,128], index: 1, kind: input, shape index: {}]
  %s2 = inlined_call_operand.vmem [shape: f32[1,128], index: 2, kind: input, shape index: {}]
  %s3 = inlined_call_operand.hbm [shape: f32[8,128], index: 3, kind: output, shape index: {}]
  %s4 = sld [smem:[#allocation0]]
  $region38: #{tpu_custom_call.1} parent=0
    _
  %s6 = ssub.s32 1, %s4
  %s7 = scalar_select 0, %s6, %s4
  $region1: #{tpu_custom_call.1} parent=0
    #allocation3 [shape = 'u8[4096]{0}', space=vmem, size = 0x1000, scoped, tag = 'input window, operand 0, single buffered']
    #allocation4 [shape = 's32[1]{0}', space=sflag, size = 0x4, scoped, tag = 'scoped memory for tpu_custom_call.1']
    #allocation5 [shape = 's32[1]{0}', space=sflag, size = 0x4, scoped, tag = 'scoped memory for tpu_custom_call.1']
    #allocation6 [shape = 'u8[32768]{0}', space=vmem, size = 0x8000, scoped, tag = 'input window, operand 1, single buffered']
    #allocation7 [shape = 's32[1]{0}', space=sflag, size = 0x4, scoped, tag = 'scoped memory for tpu_custom_call.1']
    #allocation8 [shape = 'u8[4096]{0}', space=vmem, size = 0x1000, scoped, tag = 'output window, operand 0, single buffered']
    %8 = vsyncpa [#allocation4], 0
    %9 = vsyncpa [#allocation7], 0
    %10 = vsyncpa [#allocation5], 0
    // Predicated region
    $region2: #{tpu_custom_call.1} parent=1 // pred_check
      _
    $region3: #{tpu_custom_call.1} parent=1 // pred_check_branch
      %12 = sbr.rel (0) target = $region5
    $region4: #{tpu_custom_call.1} parent=1 // pred_region
      %s14 = ssub.s32 128, 128
      %15 = vsyncadd [#allocation4], %s14
      %s17 = sshll.u32 [#allocation3], 4
      %s18 = int_to_ptr.vmem [resolvable:$true] %s17
      %20 = dma.hbm_to_vmem [thread:$0]  %s0, 128, %s18, [#allocation4]
    $region5: #{tpu_custom_call.1} parent=1 // pred_fallthru
      _
    // Predicated region
    $region6: #{tpu_custom_call.1} parent=1 // pred_check
      _
    $region7: #{tpu_custom_call.1} parent=1 // pred_check_branch
      %22 = sbr.rel (0) target = $region9
    $region8: #{tpu_custom_call.1} parent=1 // pred_region
      %s24 = ssub.s32 1024, 1024
      %25 = vsyncadd [#allocation7], %s24
      %s26 = sshll.u32 [#allocation6], 4
      %s27 = int_to_ptr.vmem [resolvable:$true] %s26
      %32 = dma.hbm_to_vmem [thread:$0]  %s1, 1024, %s27, [#allocation7], 64, 64, 4
    $region9: #{tpu_custom_call.1} parent=1 // pred_fallthru
      _
    // Predicated region
    $region10: #{tpu_custom_call.1} parent=1 // pred_check
      _
    $region11: #{tpu_custom_call.1} parent=1 // pred_check_branch
      %34 = sbr.rel (0) target = $region13
    $region12: #{tpu_custom_call.1} parent=1 // pred_region
      _
    $region13: #{tpu_custom_call.1} parent=1 // pred_fallthru
      _
    // Predicated region
    $region14: #{tpu_custom_call.1} parent=1 // pred_check
      _
    $region15: #{tpu_custom_call.1} parent=1 // pred_check_branch
      %36 = sbr.rel (0) target = $region17
    $region16: #{tpu_custom_call.1} parent=1 // pred_region
      %37 = dma.done [#allocation4], 128
    $region17: #{tpu_custom_call.1} parent=1 // pred_fallthru
      _
    // Predicated region
    $region18: #{tpu_custom_call.1} parent=1 // pred_check
      _
    $region19: #{tpu_custom_call.1} parent=1 // pred_check_branch
      %39 = sbr.rel (0) target = $region21
    $region20: #{tpu_custom_call.1} parent=1 // pred_region
      %40 = dma.done [#allocation7], 1024
    $region21: #{tpu_custom_call.1} parent=1 // pred_fallthru
      _
    %p42 = scmp.eq.s32.totalorder 0, 0
    // Predicated region
    $region22: #{tpu_custom_call.1} parent=1 // pred_check
      %p43 = pneg %p42
    $region23: #{tpu_custom_call.1} parent=1 // pred_check_branch
      %45 = sbr.rel (%p43) target = $region25
    $region24: #{tpu_custom_call.1} parent=1 // pred_region
      %v46 = vld [vmem:[%s2] sm:$0x1]
      %v48 = vlaneseq
      %v49 = vshrl.u32 %v48, 7
      %v50 = vsub.s32 0, %v49
      %v51 = vrot.slane %v46, %v50
      %53 = vst [vmem:[#allocation2] sm:$0xff] %v51
    $region25: #{tpu_custom_call.1} parent=1 // pred_fallthru
      _
    %v54 = vld [vmem:[#allocation2] sm:$0xff]
    %v55 = vld [vmem:[#allocation3] sm:$0xff]
    %v56 = vpack.c.bf16 %v55, %v55
    %v57 = vld [vmem:[#allocation6] sm:$0xf]
    %v58 = vld [vmem:[#allocation6 + $0x4] sm:$0xf]
    %v59 = vld [vmem:[#allocation6 + $0x8] sm:$0xf]
    %v60 = vld [vmem:[#allocation6 + $0xc] sm:$0xf]
    %v61 = vld [vmem:[#allocation6 + $0x10] sm:$0xf]
    %v62 = vld [vmem:[#allocation6 + $0x14] sm:$0xf]
    %v63 = vld [vmem:[#allocation6 + $0x18] sm:$0xf]
    %v64 = vld [vmem:[#allocation6 + $0x1c] sm:$0xf]
    %v65 = vld [vmem:[#allocation6 + $0x20] sm:$0xf]
    %v66 = vld [vmem:[#allocation6 + $0x24] sm:$0xf]
    %v67 = vld [vmem:[#allocation6 + $0x28] sm:$0xf]
    %v68 = vld [vmem:[#allocation6 + $0x2c] sm:$0xf]
    %v69 = vld [vmem:[#allocation6 + $0x30] sm:$0xf]
    %v70 = vld [vmem:[#allocation6 + $0x34] sm:$0xf]
    %v71 = vld [vmem:[#allocation6 + $0x38] sm:$0xf]
    %v72 = vld [vmem:[#allocation6 + $0x3c] sm:$0xf]
    %v89 = vunpack.c.l.b16 %v57
    %v90 = vunpack.c.l.b16 %v58
    %v91 = vunpack.c.l.b16 %v59
    %v92 = vunpack.c.l.b16 %v60
    %v93 = vunpack.c.l.b16 %v61
    %v94 = vunpack.c.l.b16 %v62
    %v95 = vunpack.c.l.b16 %v63
    %v96 = vunpack.c.l.b16 %v64
    %v97 = vunpack.c.l.b16 %v65
    %v98 = vunpack.c.l.b16 %v66
    %v99 = vunpack.c.l.b16 %v67
    %v100 = vunpack.c.l.b16 %v68
    %v101 = vunpack.c.l.b16 %v69
    %v102 = vunpack.c.l.b16 %v70
    %v103 = vunpack.c.l.b16 %v71
    %v104 = vunpack.c.l.b16 %v72
    %v105 = vpack.c.b16 %v90, %v89
    %v106 = vpack.c.b16 %v92, %v91
    %v107 = vpack.c.b16 %v94, %v93
    %v108 = vpack.c.b16 %v96, %v95
    %v109 = vpack.c.b16 %v98, %v97
    %v110 = vpack.c.b16 %v100, %v99
    %v111 = vpack.c.b16 %v102, %v101
    %v112 = vpack.c.b16 %v104, %v103
    %121 = vmatprep.subr.bf16.mxu0 0
    %122 = vmatpush1.bf16.msra.mxu0 %v105
    %123 = vmatprep.subr.bf16.mxu0 0
    %124 = vmatpush1.bf16.msra.mxu0 %v106
    %125 = vmatprep.subr.bf16.mxu0 0
    %126 = vmatpush1.bf16.msra.mxu0 %v107
    %127 = vmatprep.subr.bf16.mxu0 0
    %128 = vmatpush1.bf16.msra.mxu0 %v108
    %129 = vmatprep.subr.bf16.mxu0 0
    %130 = vmatpush1.bf16.msra.mxu0 %v109
    %131 = vmatprep.subr.bf16.mxu0 0
    %132 = vmatpush1.bf16.msra.mxu0 %v110
    %133 = vmatprep.subr.bf16.mxu0 0
    %134 = vmatpush1.bf16.msra.mxu0 %v111
    %135 = vmatprep.subr.bf16.mxu0 0
    %136 = vmatpush1.bf16.msra.mxu0 %v112
    %137 = vmatprep.subr.bf16.mxu0 0
    %138 = vmatpush1.bf16.msra.mxu0 0
    %139 = vmatprep.subr.bf16.mxu0 0
    %140 = vmatpush1.bf16.msra.mxu0 0
    %141 = vmatprep.subr.bf16.mxu0 0
    %142 = vmatpush1.bf16.msra.mxu0 0
    %143 = vmatprep.subr.bf16.mxu0 0
    %144 = vmatpush1.bf16.msra.mxu0 0
    %145 = vmatprep.subr.bf16.mxu0 0
    %146 = vmatpush1.bf16.msra.mxu0 0
    %147 = vmatprep.subr.bf16.mxu0 0
    %148 = vmatpush1.bf16.msra.mxu0 0
    %149 = vmatprep.subr.bf16.mxu0 0
    %150 = vmatpush1.bf16.msra.mxu0 0
    %151 = vmatprep.subr.bf16.mxu0 0
    %152 = vmatpush1.bf16.msra.mxu0 0
    %153 = vmatprep.mubr.bf16.mxu0 0
    %154 = vmatmul.mubr.bf16.gmra.mrb[0].mxu0 %v56
    %v155 = vpop.f32.mrb[0].mxu0
    %v156 = vadd.f32 0.0, %v155
    %v157 = vpop.f32.mrb[0].mxu0
    %v158 = vpop.f32.mrb[0].mxu0
    %v159 = vpop.f32.mrb[0].mxu0
    %160 = vdwg.mxu0
    %v161 = vadd.f32 %v54, %v156
    %162 = vst [vmem:[#allocation2] sm:$0xff] %v161
    // Predicated region
    $region26: #{tpu_custom_call.1} parent=1 // pred_check
      %p163 = pneg %p42
    $region27: #{tpu_custom_call.1} parent=1 // pred_check_branch
      %165 = sbr.rel (%p163) target = $region29
    $region28: #{tpu_custom_call.1} parent=1 // pred_region
      %v166 = vld [vmem:[#allocation2] sm:$0xff]
      %v167 = vxor.u32 %v166, 2147483648
      %v168 = vmul.f32 %v167, 1.442695
      %v169 = vpow.pop %v168
      %v170 = vadd.f32 %v169, 1.0
      %v171 = vrcp.pop %v170
      %v172 = vmul.f32 1.0, %v171
      %v173 = vmul.f32 %v166, %v172
      %174 = vst [vmem:[#allocation8] sm:$0xff] %v173
    $region29: #{tpu_custom_call.1} parent=1 // pred_fallthru
      _
    // Predicated region
    $region30: #{tpu_custom_call.1} parent=1 // pred_check
      _
    $region31: #{tpu_custom_call.1} parent=1 // pred_check_branch
      %176 = sbr.rel (0) target = $region33
    $region32: #{tpu_custom_call.1} parent=1 // pred_region
      %s178 = ssub.s32 128, 128
      %179 = vsyncadd [#allocation5], %s178
      %s181 = sshll.u32 [#allocation8], 4
      %s182 = int_to_ptr.vmem [resolvable:$true] %s181
      %184 = dma.vmem_to_hbm [thread:$0]  %s182, 128, %s3, [#allocation5]
    $region33: #{tpu_custom_call.1} parent=1 // pred_fallthru
      _
    // Predicated region
    $region34: #{tpu_custom_call.1} parent=1 // pred_check
      _
    $region35: #{tpu_custom_call.1} parent=1 // pred_check_branch
      %186 = sbr.rel (0) target = $region37
    $region36: #{tpu_custom_call.1} parent=1 // pred_region
      %187 = dma.done [#allocation5], 128
    $region37: #{tpu_custom_call.1} parent=1 // pred_fallthru
      _
    %188 = vsyncpa [#allocation4], 1
    %189 = vsyncpa [#allocation7], 1
    %190 = vsyncpa [#allocation5], 1

</llo_original>
